<compile_context>
chip_gen: v5e
topology: v5e:2x2
jax: 0.10.0
libtpu: 0.0.40
codegen_flags: <defaults>
</compile_context>

<pallas_src>
import functools

import jax
import jax.numpy as jnp
from jax.experimental import pallas as pl
from jax.experimental.pallas import tpu as pltpu


def _round_up(v, m):
    return ((v + m - 1) // m) * m


# ----------------------------------------------------------------------------
# Kernel 1: per-column sum and sum-of-squares, accumulated across row tiles.
# ----------------------------------------------------------------------------
def _stats_kernel(x_ref, sum_ref, sumsq_ref):
    i = pl.program_id(0)
    x = x_ref[...]
    s = jnp.sum(x, axis=0, keepdims=True)          # (1, Dp)
    ss = jnp.sum(x * x, axis=0, keepdims=True)     # (1, Dp)

    @pl.when(i == 0)
    def _():
        sum_ref[...] = s
        sumsq_ref[...] = ss

    @pl.when(i > 0)
    def _():
        sum_ref[...] += s
        sumsq_ref[...] += ss


# ----------------------------------------------------------------------------
# Kernel 2: normalize one row tile using the global column statistics.
# mode / scale / inv_n are trace-time Python constants (closed over).
# ----------------------------------------------------------------------------
def _norm_kernel(x_ref, sum_ref, sumsq_ref, o_ref, *, mode, scale, inv_n):
    eps = 1e-6
    x = x_ref[...]
    col_mean = sum_ref[...] * inv_n                # (1, Dp)

    if mode == 'PN':
        xc = x - col_mean
        # mean_i sum_j (x_ij - m_j)^2 == (1/N) * sum_ij x^2 - sum_j m_j^2
        rn2 = (eps
               + inv_n * jnp.sum(sumsq_ref[...], keepdims=True)
               - jnp.sum(col_mean * col_mean, keepdims=True))   # (1, 1)
        y = (scale * xc) * jax.lax.rsqrt(rn2)
    elif mode == 'PN-SI':
        xc = x - col_mean
        rn2 = eps + jnp.sum(xc * xc, axis=1, keepdims=True)     # (tile, 1)
        y = (scale * xc) * jax.lax.rsqrt(rn2)
    else:  # 'PN-SCS'
        rn2 = eps + jnp.sum(x * x, axis=1, keepdims=True)       # (tile, 1)
        y = (scale * x) * jax.lax.rsqrt(rn2) - col_mean

    o_ref[...] = y.astype(o_ref.dtype)


# ----------------------------------------------------------------------------
# Wrapper: pad to lane-dense / sublane-aligned shapes, pick a row tile, run
# the two kernels, slice back.
# ----------------------------------------------------------------------------
def _pairnorm_forward(x, mode, scale, tile_rows=None):
    n, d = x.shape
    dp = _round_up(d, 128)                         # lane-dense feature dim

    if tile_rows is None:
        # ~2 MiB of f32 per x tile buffer; multiple of 8 sublanes.
        budget_rows = max(8, ((2 * 1024 * 1024) // (4 * dp)) // 8 * 8)
        tile_n = min(_round_up(n, 8), budget_rows)
    else:
        assert tile_rows % 8 == 0
        tile_n = tile_rows
    np_ = _round_up(n, tile_n)
    num_tiles = np_ // tile_n

    xp = x.astype(jnp.float32)
    if (np_, dp) != (n, d):
        xp = jnp.pad(xp, ((0, np_ - n), (0, dp - d)))   # zero rows/cols: no
                                                        # effect on sum/sumsq

    # Pass 1: global per-column sum / sumsq (accumulated across row tiles).
    col_sum, col_sumsq = pl.pallas_call(
        _stats_kernel,
        out_shape=(jax.ShapeDtypeStruct((1, dp), jnp.float32),
                   jax.ShapeDtypeStruct((1, dp), jnp.float32)),
        grid_spec=pltpu.PrefetchScalarGridSpec(
            num_scalar_prefetch=0,
            grid=(num_tiles,),
            in_specs=[pl.BlockSpec((tile_n, dp), lambda i: (i, 0))],
            out_specs=[pl.BlockSpec((1, dp), lambda i: (0, 0)),
                       pl.BlockSpec((1, dp), lambda i: (0, 0))]),
        compiler_params=pltpu.CompilerParams(
            dimension_semantics=("arbitrary",)),
    )(xp)

    # Pass 2: normalize each row tile (row axis independent -> "parallel").
    kernel = functools.partial(
        _norm_kernel, mode=mode, scale=float(scale), inv_n=1.0 / n)
    yp = pl.pallas_call(
        kernel,
        out_shape=jax.ShapeDtypeStruct((np_, dp), jnp.float32),
        grid_spec=pltpu.PrefetchScalarGridSpec(
            num_scalar_prefetch=0,
            grid=(num_tiles,),
            in_specs=[pl.BlockSpec((tile_n, dp), lambda i: (i, 0)),
                      pl.BlockSpec((1, dp), lambda i: (0, 0)),
                      pl.BlockSpec((1, dp), lambda i: (0, 0))],
            out_specs=pl.BlockSpec((tile_n, dp), lambda i: (i, 0))),
        compiler_params=pltpu.CompilerParams(
            dimension_semantics=("parallel",)),
    )(xp, col_sum, col_sumsq)

    return yp[:n, :d]


class PairNorm:
    def __init__(self, mode='PN', scale=10):
        assert mode in ['None', 'PN', 'PN-SI', 'PN-SCS']
        self.mode = mode
        self.scale = float(scale)

    def __call__(self, x):
        if self.mode == 'None':
            return x
        return _pairnorm_forward(x, self.mode, self.scale)


# ----------------------------------------------------------------------------
# Pure-JAX reference (mirrors the PyTorch module exactly)
# ----------------------------------------------------------------------------
def _ref_pairnorm(x, mode, scale):
    if mode == 'None':
        return x
    col_mean = x.mean(axis=0)
    if mode == 'PN':
        x = x - col_mean
        rownorm_mean = jnp.sqrt(1e-6 + (x ** 2).sum(axis=1).mean())
        return scale * x / rownorm_mean
    if mode == 'PN-SI':
        x = x - col_mean
        rn = jnp.sqrt(1e-6 + (x ** 2).sum(axis=1, keepdims=True))
        return scale * x / rn
    # 'PN-SCS'
    rn = jnp.sqrt(1e-6 + (x ** 2).sum(axis=1, keepdims=True))
    return scale * x / rn - col_mean


if __name__ == "__main__":
    key = jax.random.PRNGKey(0)
    k1, k2 = jax.random.split(key)

    # graph-style input: [num_nodes, feat_dim]; odd sizes exercise padding
    n, d = 77, 48
    x = jax.random.normal(k1, (n, d), jnp.float32)

    for mode in ("None", "PN", "PN-SI", "PN-SCS"):
        pn = PairNorm(mode=mode, scale=10)
        out = jax.block_until_ready(pn(x))
        ref = _ref_pairnorm(x, mode, 10.0)
        assert out.shape == (n, d)
        assert jnp.allclose(out, ref, atol=1e-4, rtol=1e-4), (
            f"{mode}: max abs diff = {jnp.max(jnp.abs(out - ref))}")

    # multi-tile path: several row tiles to exercise the cross-tile
    # sum/sumsq accumulation (grid-axis reduction) in the stats kernel
    n2, d2 = 96, 48
    x2 = jax.random.normal(k2, (n2, d2), jnp.float32)
    for mode in ("PN", "PN-SI", "PN-SCS"):
        out = jax.block_until_ready(
            _pairnorm_forward(x2, mode, 10.0, tile_rows=32))
        ref = _ref_pairnorm(x2, mode, 10.0)
        assert jnp.allclose(out, ref, atol=1e-4, rtol=1e-4), (
            f"{mode} tiled: max abs diff = {jnp.max(jnp.abs(out - ref))}")

    print("KERNEL_OK")
</pallas_src>

<mosaic_0001>
module attributes {stable_mosaic.version = 11 : i64} {
  func.func @_stats_kernel(%arg0: i32, %arg1: memref<80x128xf32, #tpu.memory_space<vmem>>, %arg2: memref<1x128xf32, #tpu.memory_space<vmem>>, %arg3: memref<1x128xf32, #tpu.memory_space<vmem>>) attributes {dimension_semantics = [#tpu.dimension_semantics<arbitrary>], iteration_bounds = array<i64: 1>, scalar_prefetch = 0 : i64, scratch_operands = 0 : i64, tpu.core_type = #tpu.core_type<tc>, window_params = [{transform_indices = @transform_0, window_bounds = array<i64: 80, 128>}, {pipeline_mode = #tpu.pipeline_mode<synchronous>, transform_indices = @transform_1, window_bounds = array<i64: 1, 128>}, {pipeline_mode = #tpu.pipeline_mode<synchronous>, transform_indices = @transform_2, window_bounds = array<i64: 1, 128>}]} {
    %c0 = arith.constant 0 : index
    %c0_0 = arith.constant 0 : index
    %0 = vector.load %arg1[%c0, %c0_0] : memref<80x128xf32, #tpu.memory_space<vmem>>, vector<80x128xf32>
    %cst = arith.constant dense<0.000000e+00> : vector<128xf32>
    %1 = vector.multi_reduction <add>, %0, %cst [0] : vector<80x128xf32> to vector<128xf32>
    %2 = vector.shape_cast %1 : vector<128xf32> to vector<1x128xf32>
    %3 = arith.mulf %0, %0 : vector<80x128xf32>
    %cst_1 = arith.constant dense<0.000000e+00> : vector<128xf32>
    %4 = vector.multi_reduction <add>, %3, %cst_1 [0] : vector<80x128xf32> to vector<128xf32>
    %5 = vector.shape_cast %4 : vector<128xf32> to vector<1x128xf32>
    %c0_i32 = arith.constant 0 : i32
    %6 = arith.cmpi eq, %arg0, %c0_i32 : i32
    %7 = arith.extui %6 : i1 to i32
    %c0_i32_2 = arith.constant 0 : i32
    %8 = arith.cmpi ne, %7, %c0_i32_2 : i32
    scf.if %8 {
      %c0_5 = arith.constant 0 : index
      %c0_6 = arith.constant 0 : index
      %12 = vector.load %arg2[%c0_5, %c0_6] : memref<1x128xf32, #tpu.memory_space<vmem>>, vector<1x128xf32>
      tpu.vector_store %arg2[%c0_5, %c0_6], %2 {strides = array<i32>} : memref<1x128xf32, #tpu.memory_space<vmem>>, vector<1x128xf32>,
      %c0_7 = arith.constant 0 : index
      %c0_8 = arith.constant 0 : index
      %13 = vector.load %arg3[%c0_7, %c0_8] : memref<1x128xf32, #tpu.memory_space<vmem>>, vector<1x128xf32>
      tpu.vector_store %arg3[%c0_7, %c0_8], %5 {strides = array<i32>} : memref<1x128xf32, #tpu.memory_space<vmem>>, vector<1x128xf32>,
    } else {
    }
    %c0_i32_3 = arith.constant 0 : i32
    %9 = arith.cmpi sgt, %arg0, %c0_i32_3 : i32
    %10 = arith.extui %9 : i1 to i32
    %c0_i32_4 = arith.constant 0 : i32
    %11 = arith.cmpi ne, %10, %c0_i32_4 : i32
    scf.if %11 {
      %c0_5 = arith.constant 0 : index
      %c0_6 = arith.constant 0 : index
      %12 = vector.load %arg2[%c0_5, %c0_6] : memref<1x128xf32, #tpu.memory_space<vmem>>, vector<1x128xf32>
      %13 = arith.addf %12, %2 : vector<1x128xf32>
      %c0_7 = arith.constant 0 : index
      %c0_8 = arith.constant 0 : index
      %14 = vector.load %arg2[%c0_7, %c0_8] : memref<1x128xf32, #tpu.memory_space<vmem>>, vector<1x128xf32>
      tpu.vector_store %arg2[%c0_7, %c0_8], %13 {strides = array<i32>} : memref<1x128xf32, #tpu.memory_space<vmem>>, vector<1x128xf32>,
      %c0_9 = arith.constant 0 : index
      %c0_10 = arith.constant 0 : index
      %15 = vector.load %arg3[%c0_9, %c0_10] : memref<1x128xf32, #tpu.memory_space<vmem>>, vector<1x128xf32>
      %16 = arith.addf %15, %5 : vector<1x128xf32>
      %c0_11 = arith.constant 0 : index
      %c0_12 = arith.constant 0 : index
      %17 = vector.load %arg3[%c0_11, %c0_12] : memref<1x128xf32, #tpu.memory_space<vmem>>, vector<1x128xf32>
      tpu.vector_store %arg3[%c0_11, %c0_12], %16 {strides = array<i32>} : memref<1x128xf32, #tpu.memory_space<vmem>>, vector<1x128xf32>,
    } else {
    }
    return
  }
  func.func @transform_0(%arg0: i32) -> (i32, i32) {
    %c0_i32 = arith.constant 0 : i32
    %c0_i32_0 = arith.constant 0 : i32
    return %arg0, %c0_i32 : i32, i32
  }
  func.func @transform_1(%arg0: i32) -> (i32, i32) {
    %c0_i32 = arith.constant 0 : i32
    %c0_i32_0 = arith.constant 0 : i32
    %c0_i32_1 = arith.constant 0 : i32
    return %c0_i32, %c0_i32_0 : i32, i32
  }
  func.func @transform_2(%arg0: i32) -> (i32, i32) {
    %c0_i32 = arith.constant 0 : i32
    %c0_i32_0 = arith.constant 0 : i32
    %c0_i32_1 = arith.constant 0 : i32
    return %c0_i32, %c0_i32_0 : i32, i32
  }
}

</mosaic_0001>

<llo_original>
// kernel: tpu_custom_call.1
$region0: #{tpu_custom_call.1}
  #allocation0 [shape = 'u32[]', space=smem, size = 0x4, offset = 0x4, fixed_abs, tag = 'smem constant byte address 0x4 - core index']
  #allocation1 [shape = 'u32[72,128]{1,0:T(1,128)}', space=vmem, size = 0x9000, scoped, tag = 'internal scratch']
  %s0 = inlined_call_operand.hbm [shape: f32[80,128], index: 0, kind: input, shape index: {}]
  %s1 = inlined_call_operand.hbm [shape: f32[1,128], index: 1, kind: output, shape index: {0}]
  %s2 = inlined_call_operand.hbm [shape: f32[1,128], index: 2, kind: output, shape index: {1}]
  %3 = xla_tuple %s1, %s2
  %s4 = sld [smem:[#allocation0]]
  $region34: #{tpu_custom_call.1} parent=0
    _
  %s6 = ssub.s32 1, %s4
  %s7 = scalar_select 0, %s6, %s4
  $region1: #{tpu_custom_call.1} parent=0
    #allocation2 [shape = 'u8[40960]{0}', space=vmem, size = 0xa000, scoped, tag = 'input window, operand 0, single buffered']
    #allocation3 [shape = 's32[1]{0}', space=sflag, size = 0x4, scoped, tag = 'scoped memory for tpu_custom_call.1']
    #allocation4 [shape = 's32[1]{0}', space=sflag, size = 0x4, scoped, tag = 'scoped memory for tpu_custom_call.1']
    #allocation5 [shape = 'u8[512]{0}', space=vmem, size = 0x400, scoped, tag = 'output window, operand 0, single buffered']
    #allocation6 [shape = 'u8[512]{0}', space=vmem, size = 0x400, scoped, tag = 'output window, operand 1, single buffered']
    #allocation7 [shape = 's32[1]{0}', space=sflag, size = 0x4, scoped, tag = 'scoped memory for tpu_custom_call.1']
    %8 = vsyncpa [#allocation3], 0
    %9 = vsyncpa [#allocation4], 0
    %10 = vsyncpa [#allocation7], 0
    // Predicated region
    $region2: #{tpu_custom_call.1} parent=1 // pred_check
      _
    $region3: #{tpu_custom_call.1} parent=1 // pred_check_branch
      %12 = sbr.rel (0) target = $region5
    $region4: #{tpu_custom_call.1} parent=1 // pred_region
      %14 = vsyncadd [#allocation3], 0
      %s15 = sshll.u32 %s0, 4
      %s16 = int_to_ptr.hbm [resolvable:$true] %s15
      %s17 = sshll.u32 [#allocation2], 4
      %s18 = int_to_ptr.vmem [resolvable:$true] %s17
      %23 = dma.hbm_to_vmem [thread:$0]  %s16, 1280, %s18, [#allocation3], 128, 128, 8
    $region5: #{tpu_custom_call.1} parent=1 // pred_fallthru
      _
    // Predicated region
    $region6: #{tpu_custom_call.1} parent=1 // pred_check
      _
    $region7: #{tpu_custom_call.1} parent=1 // pred_check_branch
      %25 = sbr.rel (0) target = $region9
    $region8: #{tpu_custom_call.1} parent=1 // pred_region
      %27 = dma.done [#allocation3], 1280
    $region9: #{tpu_custom_call.1} parent=1 // pred_fallthru
      _
    %v28 = vld [vmem:[#allocation2] sm:$0xff]
    %v29 = vld [vmem:[#allocation2 + $0x8] sm:$0xff]
    %v30 = vld [vmem:[#allocation2 + $0x10] sm:$0xff]
    %v31 = vld [vmem:[#allocation2 + $0x18] sm:$0xff]
    %v32 = vld [vmem:[#allocation2 + $0x20] sm:$0xff]
    %v33 = vld [vmem:[#allocation2 + $0x28] sm:$0xff]
    %v34 = vld [vmem:[#allocation2 + $0x30] sm:$0xff]
    %v35 = vld [vmem:[#allocation2 + $0x38] sm:$0xff]
    %v36 = vld [vmem:[#allocation2 + $0x40] sm:$0xff]
    %v37 = vld [vmem:[#allocation2 + $0x48] sm:$0xff]
    %v38 = vadd.f32 %v28, %v29
    %v39 = vadd.f32 %v38, %v30
    %v40 = vadd.f32 %v39, %v31
    %v41 = vadd.f32 %v40, %v32
    %v42 = vadd.f32 %v41, %v33
    %v43 = vadd.f32 %v42, %v34
    %v44 = vadd.f32 %v43, %v35
    %v45 = vadd.f32 %v44, %v36
    %v46 = vadd.f32 %v45, %v37
    %v47 = vrot.slane %v46, 4
    %v48 = vadd.f32 %v46, %v47
    %v49 = vrot.slane %v48, 2
    %v50 = vadd.f32 %v48, %v49
    %v51 = vrot.slane %v50, 1
    %v52 = vadd.f32 %v50, %v51
    %v53 = vmul.f32 %v28, %v28
    %v54 = vmul.f32 %v29, %v29
    %v55 = vmul.f32 %v30, %v30
    %v56 = vmul.f32 %v31, %v31
    %v57 = vmul.f32 %v32, %v32
    %v58 = vmul.f32 %v33, %v33
    %v59 = vmul.f32 %v34, %v34
    %v60 = vmul.f32 %v35, %v35
    %v61 = vmul.f32 %v36, %v36
    %v62 = vmul.f32 %v37, %v37
    %v63 = vadd.f32 %v53, %v54
    %v64 = vadd.f32 %v63, %v55
    %v65 = vadd.f32 %v64, %v56
    %v66 = vadd.f32 %v65, %v57
    %v67 = vadd.f32 %v66, %v58
    %v68 = vadd.f32 %v67, %v59
    %v69 = vadd.f32 %v68, %v60
    %v70 = vadd.f32 %v69, %v61
    %v71 = vadd.f32 %v70, %v62
    %v72 = vrot.slane %v71, 4
    %v73 = vadd.f32 %v71, %v72
    %v74 = vrot.slane %v73, 2
    %v75 = vadd.f32 %v73, %v74
    %v76 = vrot.slane %v75, 1
    %v77 = vadd.f32 %v75, %v76
    %p78 = scmp.eq.s32.totalorder 0, 0
    // Predicated region
    $region10: #{tpu_custom_call.1} parent=1 // pred_check
      %p79 = pneg %p78
    $region11: #{tpu_custom_call.1} parent=1 // pred_check_branch
      %81 = sbr.rel (%p79) target = $region13
    $region12: #{tpu_custom_call.1} parent=1 // pred_region
      %82 = vst [vmem:[#allocation5] sm:$0x1] %v52
      %83 = vst [vmem:[#allocation6] sm:$0x1] %v77
    $region13: #{tpu_custom_call.1} parent=1 // pred_fallthru
      _
    %p84 = scmp.gt.s32.totalorder 0, 0
    // Predicated region
    $region14: #{tpu_custom_call.1} parent=1 // pred_check
      %p85 = pneg %p84
    $region15: #{tpu_custom_call.1} parent=1 // pred_check_branch
      %87 = sbr.rel (%p85) target = $region17
    $region16: #{tpu_custom_call.1} parent=1 // pred_region
      %v88 = vld [vmem:[#allocation5] sm:$0x1]
      %v89 = vadd.f32 %v88, %v52
      %90 = vst [vmem:[#allocation5] sm:$0x1] %v89
      %v91 = vld [vmem:[#allocation6] sm:$0x1]
      %v92 = vadd.f32 %v91, %v77
      %93 = vst [vmem:[#allocation6] sm:$0x1] %v92
    $region17: #{tpu_custom_call.1} parent=1 // pred_fallthru
      _
    // Predicated region
    $region18: #{tpu_custom_call.1} parent=1 // pred_check
      _
    $region19: #{tpu_custom_call.1} parent=1 // pred_check_branch
      %95 = sbr.rel (0) target = $region21
    $region20: #{tpu_custom_call.1} parent=1 // pred_region
      %97 = vsyncadd [#allocation4], 0
      %s99 = sshll.u32 [#allocation5], 4
      %s100 = int_to_ptr.vmem [resolvable:$true] %s99
      %s101 = sshll.u32 %s1, 4
      %s102 = int_to_ptr.hbm [resolvable:$true] %s101
      %104 = dma.vmem_to_hbm [thread:$0]  %s100, 16, %s102, [#allocation4]
    $region21: #{tpu_custom_call.1} parent=1 // pred_fallthru
      _
    // Predicated region
    $region22: #{tpu_custom_call.1} parent=1 // pred_check
      _
    $region23: #{tpu_custom_call.1} parent=1 // pred_check_branch
      %106 = sbr.rel (0) target = $region25
    $region24: #{tpu_custom_call.1} parent=1 // pred_region
      %108 = vsyncadd [#allocation7], 0
      %s110 = sshll.u32 [#allocation6], 4
      %s111 = int_to_ptr.vmem [resolvable:$true] %s110
      %s112 = sshll.u32 %s2, 4
      %s113 = int_to_ptr.hbm [resolvable:$true] %s112
      %115 = dma.vmem_to_hbm [thread:$0]  %s111, 16, %s113, [#allocation7]
    $region25: #{tpu_custom_call.1} parent=1 // pred_fallthru
      _
    // Predicated region
    $region26: #{tpu_custom_call.1} parent=1 // pred_check
      _
    $region27: #{tpu_custom_call.1} parent=1 // pred_check_branch
      %117 = sbr.rel (0) target = $region29
    $region28: #{tpu_custom_call.1} parent=1 // pred_region
      %119 = dma.done [#allocation4], 16
    $region29: #{tpu_custom_call.1} parent=1 // pred_fallthru
      _
    // Predicated region
    $region30: #{tpu_custom_call.1} parent=1 // pred_check
      _
    $region31: #{tpu_custom_call.1} parent=1 // pred_check_branch
      %121 = sbr.rel (0) target = $region33
    $region32: #{tpu_custom_call.1} parent=1 // pred_region
      %123 = dma.done [#allocation7], 16
    $region33: #{tpu_custom_call.1} parent=1 // pred_fallthru
      _
    %124 = vsyncpa [#allocation3], 1
    %125 = vsyncpa [#allocation4], 1
    %126 = vsyncpa [#allocation7], 1

</llo_original>
